<compile_context>
chip_gen: v6e
topology: v6e:2x2x1
jax: 0.10.0
libtpu: 0.0.40
codegen_flags: <defaults>
</compile_context>

<pallas_src>
import math
import functools

import jax
import jax.numpy as jnp
from jax.experimental import pallas as pl
from jax.experimental.pallas import tpu as pltpu

_LANE = 128      # batch rows packed onto the lane axis, one (R,128) plane per feature
_MAX_TR = 256    # rows-of-128 per grid step -> 32768 batch rows (~768 KiB real data/step)


def probe_kernel(feat_ref, wf_ref, out_ref):
    """Folded-affine Probe forward, feature-major lane-dense layout.

    feat_ref : VMEM (3, TR, 128)  planes [lon, lat, month], batch on lanes
    wf_ref   : SMEM (15,) f32     [w_lon(3) | w_lat(3) | v_sin(3) | v_cos(3) | b(3)]
    out_ref  : VMEM (3, TR, 128)  plane j = output column j
    """
    lon = feat_ref[0]                                   # (TR, 128) fully dense vregs
    lat = feat_ref[1]
    ang = feat_ref[2] * (2.0 * math.pi / 12.0)          # month / 12 * 2*pi
    # TODO(synk): month is an integer 1..12 in the PyTorch caller; a branchless
    # 12-way compare+select LUT would beat the VPU sin/cos polynomials if VALU
    # ever becomes the saturating slot again (kept sin/cos for exact semantics).
    s = jnp.sin(ang)
    c = jnp.cos(ang)
    for j in range(3):                                  # unrolled at trace time
        out_ref[j] = (lon * wf_ref[j]                   # scalar-broadcast mul-adds
                      + lat * wf_ref[3 + j]
                      + s * wf_ref[6 + j]
                      + c * wf_ref[9 + j]
                      + wf_ref[12 + j])


def probe_forward(lonlat, month, params):
    """lonlat: (B, 1, 2), month: (B,)  ->  (B, 3) float32."""
    wpos, bpos, wenc, benc, wmlp, bmlp = params
    B = lonlat.shape[0]
    E = wpos.shape[1]

    # --- one-time affine fold (wrapper glue; constant under jit) ------------
    wloc = wenc[:E]                                     # (E, D)
    w_total = (wpos @ wloc) @ wmlp                      # (2, 3): rows [lon, lat]
    v_sin = wenc[E:E + 1] @ wmlp                        # (1, 3)
    v_cos = wenc[E + 1:E + 2] @ wmlp                    # (1, 3)
    b_total = (bpos @ wloc + benc) @ wmlp + bmlp        # (3,)
    wf = jnp.concatenate(
        [w_total.reshape(-1), v_sin.reshape(-1),
         v_cos.reshape(-1), b_total.reshape(-1)]).astype(jnp.float32)   # (15,) -> SMEM

    # --- feature-major, lane-dense packing: one fused (3, R, 128) slab ------
    ll = lonlat.reshape(B, 2).astype(jnp.float32)
    feat = jnp.stack(
        [ll[:, 0], ll[:, 1], month.reshape(B).astype(jnp.float32)], axis=0)   # (3, B)
    R = pl.cdiv(B, _LANE)
    Bp = R * _LANE
    feat = jnp.pad(feat, ((0, 0), (0, Bp - B))).reshape(3, R, _LANE)

    TR = R if R <= _MAX_TR else _MAX_TR                 # full dim or multiple of 8
    grid = (pl.cdiv(R, TR),)

    cost = pl.CostEstimate(
        flops=30 * Bp,                                  # ~10 mul/add per output col per row
        transcendentals=2 * Bp,                         # sin + cos per row
        bytes_accessed=4 * (Bp * 6 + 15),               # 3 in + 3 out planes + weights
    )

    out = pl.pallas_call(
        probe_kernel,
        out_shape=jax.ShapeDtypeStruct((3, R, _LANE), jnp.float32),
        grid_spec=pltpu.PrefetchScalarGridSpec(
            num_scalar_prefetch=0,
            grid=grid,
            in_specs=[
                pl.BlockSpec((3, TR, _LANE), lambda i: (0, i, 0)),      # fused features
                pl.BlockSpec(memory_space=pltpu.MemorySpace.SMEM),      # 15 folded weights
            ],
            out_specs=pl.BlockSpec((3, TR, _LANE), lambda i: (0, i, 0)),
        ),
        compiler_params=pltpu.CompilerParams(
            dimension_semantics=(pltpu.PARALLEL,)),
        cost_estimate=cost,
    )(feat, wf)

    # unpack: (3, R, 128) -> (Bp, 3) -> drop padded tail rows
    return out.reshape(3, Bp).T[:B]


def make_params(key, embed_dim, mlp_input_len):
    """Deterministic synthetic parameters (no checkpoint load)."""
    k = jax.random.split(key, 6)
    wpos = jax.random.normal(k[0], (2, embed_dim), jnp.float32) * 0.1
    bpos = jax.random.normal(k[1], (embed_dim,), jnp.float32) * 0.01
    wenc = jax.random.normal(k[2], (embed_dim + 2, mlp_input_len), jnp.float32) * 0.1
    benc = jax.random.normal(k[3], (mlp_input_len,), jnp.float32) * 0.01
    wmlp = jax.random.normal(k[4], (mlp_input_len, 3), jnp.float32) * 0.1
    bmlp = jax.random.normal(k[5], (3,), jnp.float32) * 0.01
    return (wpos, bpos, wenc, benc, wmlp, bmlp)


def probe_forward_ref(lonlat, month, params):
    """Pure-JAX reference mirroring the PyTorch forward stage-by-stage (f32)."""
    wpos, bpos, wenc, benc, wmlp, bmlp = params
    B = lonlat.shape[0]
    loc = lonlat.reshape(B, 2).astype(jnp.float32) @ wpos + bpos          # pos_embedding + squeeze(1)
    ang = month.astype(jnp.float32) / 12.0 * (2.0 * math.pi)
    loc_month = jnp.concatenate(
        [loc, jnp.sin(ang)[:, None], jnp.cos(ang)[:, None]], axis=-1)
    x = loc_month @ wenc + benc                                           # location_encoder
    return x @ wmlp + bmlp                                                # mlp (linear probe)


if __name__ == "__main__":
    B = 8            # batch
    E = 32           # pos_embedding output dim
    D = 64           # mlp_input_len (location_encoder output dim)

    key = jax.random.PRNGKey(0)
    k_ll, k_m, k_p = jax.random.split(key, 3)

    # lonlat in degrees, shape (B, 1, 2) as implied by .squeeze(dim=1)
    lonlat = jnp.stack(
        [jax.random.uniform(k_ll, (B, 1), minval=-180.0, maxval=180.0),
         jax.random.uniform(jax.random.fold_in(k_ll, 1), (B, 1), minval=-90.0, maxval=90.0)],
        axis=-1)                                                   # (B, 1, 2)
    month = jax.random.randint(k_m, (B,), 1, 13).astype(jnp.float32)  # (B,)

    params = make_params(k_p, E, D)

    # jit so the wrapper-side affine fold + feature packing are compile-time glue.
    probe = jax.jit(functools.partial(probe_forward, params=params))
    out = probe(lonlat, month)
    out = jax.block_until_ready(out)

    ref = probe_forward_ref(lonlat, month, params)
    assert out.shape == (B, 3) and out.dtype == jnp.float32
    # Slightly loose tolerance: the weight fold reorders the f32 summations
    # relative to the stage-by-stage reference.
    assert jnp.allclose(out, ref, rtol=1e-3, atol=1e-3), "mismatch vs reference"

    print("KERNEL_OK")
</pallas_src>

<mosaic_0001>
module attributes {stable_mosaic.version = 11 : i64} {
  func.func @probe_kernel(%arg0: i32, %arg1: memref<3x1x128xf32, #tpu.memory_space<vmem>>, %arg2: memref<15xf32, #tpu.memory_space<smem>>, %arg3: memref<3x1x128xf32, #tpu.memory_space<vmem>>) attributes {dimension_semantics = [#tpu.dimension_semantics<parallel>], iteration_bounds = array<i64: 1>, scalar_prefetch = 0 : i64, scratch_operands = 0 : i64, tpu.core_type = #tpu.core_type<tc>, window_params = [{transform_indices = @transform_0, window_bounds = array<i64: 3, 1, 128>}, {transform_indices = @transform_1, window_bounds = array<i64: 15>}, {transform_indices = @transform_2, window_bounds = array<i64: 3, 1, 128>}]} {
    %c0 = arith.constant 0 : index
    %c0_0 = arith.constant 0 : index
    %c0_1 = arith.constant 0 : index
    %0 = vector.load %arg1[%c0, %c0_0, %c0_1] : memref<3x1x128xf32, #tpu.memory_space<vmem>>, vector<1x1x128xf32>
    %1 = vector.shape_cast %0 : vector<1x1x128xf32> to vector<1x128xf32>
    %c1 = arith.constant 1 : index
    %c0_2 = arith.constant 0 : index
    %c0_3 = arith.constant 0 : index
    %2 = vector.load %arg1[%c1, %c0_2, %c0_3] : memref<3x1x128xf32, #tpu.memory_space<vmem>>, vector<1x1x128xf32>
    %3 = vector.shape_cast %2 : vector<1x1x128xf32> to vector<1x128xf32>
    %c2 = arith.constant 2 : index
    %c0_4 = arith.constant 0 : index
    %c0_5 = arith.constant 0 : index
    %4 = vector.load %arg1[%c2, %c0_4, %c0_5] : memref<3x1x128xf32, #tpu.memory_space<vmem>>, vector<1x1x128xf32>
    %5 = vector.shape_cast %4 : vector<1x1x128xf32> to vector<1x128xf32>
    %cst = arith.constant 0.52359879 : f32
    %6 = vector.broadcast %cst : f32 to vector<1x128xf32>
    %7 = arith.mulf %5, %6 : vector<1x128xf32>
    %8 = math.sin %7 : vector<1x128xf32>
    %9 = math.cos %7 : vector<1x128xf32>
    %c0_6 = arith.constant 0 : index
    %10 = memref.load %arg2[%c0_6] : memref<15xf32, #tpu.memory_space<smem>>
    %11 = vector.broadcast %10 : f32 to vector<1x128xf32>
    %12 = arith.mulf %1, %11 : vector<1x128xf32>
    %c3 = arith.constant 3 : index
    %13 = memref.load %arg2[%c3] : memref<15xf32, #tpu.memory_space<smem>>
    %14 = vector.broadcast %13 : f32 to vector<1x128xf32>
    %15 = arith.mulf %3, %14 : vector<1x128xf32>
    %16 = arith.addf %12, %15 : vector<1x128xf32>
    %c6 = arith.constant 6 : index
    %17 = memref.load %arg2[%c6] : memref<15xf32, #tpu.memory_space<smem>>
    %18 = vector.broadcast %17 : f32 to vector<1x128xf32>
    %19 = arith.mulf %8, %18 : vector<1x128xf32>
    %20 = arith.addf %16, %19 : vector<1x128xf32>
    %c9 = arith.constant 9 : index
    %21 = memref.load %arg2[%c9] : memref<15xf32, #tpu.memory_space<smem>>
    %22 = vector.broadcast %21 : f32 to vector<1x128xf32>
    %23 = arith.mulf %9, %22 : vector<1x128xf32>
    %24 = arith.addf %20, %23 : vector<1x128xf32>
    %c12 = arith.constant 12 : index
    %25 = memref.load %arg2[%c12] : memref<15xf32, #tpu.memory_space<smem>>
    %26 = vector.broadcast %25 : f32 to vector<1x128xf32>
    %27 = arith.addf %24, %26 : vector<1x128xf32>
    %c0_7 = arith.constant 0 : index
    %c0_8 = arith.constant 0 : index
    %c0_9 = arith.constant 0 : index
    %28 = vector.load %arg3[%c0_7, %c0_8, %c0_9] : memref<3x1x128xf32, #tpu.memory_space<vmem>>, vector<1x1x128xf32>
    %29 = vector.shape_cast %28 : vector<1x1x128xf32> to vector<1x128xf32>
    %30 = vector.shape_cast %27 : vector<1x128xf32> to vector<1x1x128xf32>
    tpu.vector_store %arg3[%c0_7, %c0_8, %c0_9], %30 {strides = array<i32>} : memref<3x1x128xf32, #tpu.memory_space<vmem>>, vector<1x1x128xf32>,
    %c1_10 = arith.constant 1 : index
    %31 = memref.load %arg2[%c1_10] : memref<15xf32, #tpu.memory_space<smem>>
    %32 = vector.broadcast %31 : f32 to vector<1x128xf32>
    %33 = arith.mulf %1, %32 : vector<1x128xf32>
    %c4 = arith.constant 4 : index
    %34 = memref.load %arg2[%c4] : memref<15xf32, #tpu.memory_space<smem>>
    %35 = vector.broadcast %34 : f32 to vector<1x128xf32>
    %36 = arith.mulf %3, %35 : vector<1x128xf32>
    %37 = arith.addf %33, %36 : vector<1x128xf32>
    %c7 = arith.constant 7 : index
    %38 = memref.load %arg2[%c7] : memref<15xf32, #tpu.memory_space<smem>>
    %39 = vector.broadcast %38 : f32 to vector<1x128xf32>
    %40 = arith.mulf %8, %39 : vector<1x128xf32>
    %41 = arith.addf %37, %40 : vector<1x128xf32>
    %c10 = arith.constant 10 : index
    %42 = memref.load %arg2[%c10] : memref<15xf32, #tpu.memory_space<smem>>
    %43 = vector.broadcast %42 : f32 to vector<1x128xf32>
    %44 = arith.mulf %9, %43 : vector<1x128xf32>
    %45 = arith.addf %41, %44 : vector<1x128xf32>
    %c13 = arith.constant 13 : index
    %46 = memref.load %arg2[%c13] : memref<15xf32, #tpu.memory_space<smem>>
    %47 = vector.broadcast %46 : f32 to vector<1x128xf32>
    %48 = arith.addf %45, %47 : vector<1x128xf32>
    %c1_11 = arith.constant 1 : index
    %c0_12 = arith.constant 0 : index
    %c0_13 = arith.constant 0 : index
    %49 = vector.load %arg3[%c1_11, %c0_12, %c0_13] : memref<3x1x128xf32, #tpu.memory_space<vmem>>, vector<1x1x128xf32>
    %50 = vector.shape_cast %49 : vector<1x1x128xf32> to vector<1x128xf32>
    %51 = vector.shape_cast %48 : vector<1x128xf32> to vector<1x1x128xf32>
    tpu.vector_store %arg3[%c1_11, %c0_12, %c0_13], %51 {strides = array<i32>} : memref<3x1x128xf32, #tpu.memory_space<vmem>>, vector<1x1x128xf32>,
    %c2_14 = arith.constant 2 : index
    %52 = memref.load %arg2[%c2_14] : memref<15xf32, #tpu.memory_space<smem>>
    %53 = vector.broadcast %52 : f32 to vector<1x128xf32>
    %54 = arith.mulf %1, %53 : vector<1x128xf32>
    %c5 = arith.constant 5 : index
    %55 = memref.load %arg2[%c5] : memref<15xf32, #tpu.memory_space<smem>>
    %56 = vector.broadcast %55 : f32 to vector<1x128xf32>
    %57 = arith.mulf %3, %56 : vector<1x128xf32>
    %58 = arith.addf %54, %57 : vector<1x128xf32>
    %c8 = arith.constant 8 : index
    %59 = memref.load %arg2[%c8] : memref<15xf32, #tpu.memory_space<smem>>
    %60 = vector.broadcast %59 : f32 to vector<1x128xf32>
    %61 = arith.mulf %8, %60 : vector<1x128xf32>
    %62 = arith.addf %58, %61 : vector<1x128xf32>
    %c11 = arith.constant 11 : index
    %63 = memref.load %arg2[%c11] : memref<15xf32, #tpu.memory_space<smem>>
    %64 = vector.broadcast %63 : f32 to vector<1x128xf32>
    %65 = arith.mulf %9, %64 : vector<1x128xf32>
    %66 = arith.addf %62, %65 : vector<1x128xf32>
    %c14 = arith.constant 14 : index
    %67 = memref.load %arg2[%c14] : memref<15xf32, #tpu.memory_space<smem>>
    %68 = vector.broadcast %67 : f32 to vector<1x128xf32>
    %69 = arith.addf %66, %68 : vector<1x128xf32>
    %c2_15 = arith.constant 2 : index
    %c0_16 = arith.constant 0 : index
    %c0_17 = arith.constant 0 : index
    %70 = vector.load %arg3[%c2_15, %c0_16, %c0_17] : memref<3x1x128xf32, #tpu.memory_space<vmem>>, vector<1x1x128xf32>
    %71 = vector.shape_cast %70 : vector<1x1x128xf32> to vector<1x128xf32>
    %72 = vector.shape_cast %69 : vector<1x128xf32> to vector<1x1x128xf32>
    tpu.vector_store %arg3[%c2_15, %c0_16, %c0_17], %72 {strides = array<i32>} : memref<3x1x128xf32, #tpu.memory_space<vmem>>, vector<1x1x128xf32>,
    return
  }
  func.func @transform_0(%arg0: i32) -> (i32, i32, i32) {
    %c0_i32 = arith.constant 0 : i32
    %c0_i32_0 = arith.constant 0 : i32
    %c0_i32_1 = arith.constant 0 : i32
    return %c0_i32, %arg0, %c0_i32_0 : i32, i32, i32
  }
  func.func @transform_1(%arg0: i32) -> i32 {
    %c0_i32 = arith.constant 0 : i32
    %c0_i32_0 = arith.constant 0 : i32
    return %c0_i32 : i32
  }
  func.func @transform_2(%arg0: i32) -> (i32, i32, i32) {
    %c0_i32 = arith.constant 0 : i32
    %c0_i32_0 = arith.constant 0 : i32
    %c0_i32_1 = arith.constant 0 : i32
    return %c0_i32, %arg0, %c0_i32_0 : i32, i32, i32
  }
}

</mosaic_0001>

<llo_original>
// kernel: probe_forward.1
$region0: #{probe_forward.1}
  #allocation0 [shape = 'u32[]', space=smem, size = 0x4, offset = 0x4, fixed_abs, tag = 'smem constant byte address 0x4 - core index']
  #allocation1 [shape = 'u32[144,128]{1,0:T(1,128)}', space=vmem, size = 0x12000, scoped, tag = 'internal scratch']
  %s0 = inlined_call_operand.vmem [shape: f32[3,1,128], index: 0, kind: input, shape index: {}]
  %s1 = inlined_call_operand.vmem [shape: f32[15], index: 1, kind: input, shape index: {}]
  %s2 = inlined_call_operand.vmem [shape: f32[3,1,128], index: 2, kind: output, shape index: {}]
  %s3 = sld [smem:[#allocation0]]
  $region22: #{probe_forward.1} parent=0
    _
  %s5 = ssub.s32 1, %s3
  %s6 = scalar_select 0, %s5, %s3
  $region1: #{probe_forward.1} parent=0
    #allocation2 [shape = 'u8[512]{0}', space=smem, size = 0x200, scoped, tag = 'input window, operand 1, single buffered']
    #allocation3 [shape = 's32[1]{0}', space=sflag, size = 0x4, scoped, tag = 'scoped memory for probe_forward.1']
    %7 = vsyncpa [#allocation3], 0
    // Predicated region
    $region2: #{probe_forward.1} parent=1 // pred_check
      _
    $region3: #{probe_forward.1} parent=1 // pred_check_branch
      %9 = sbr.rel (0) target = $region5
    $region4: #{probe_forward.1} parent=1 // pred_region
      _
    $region5: #{probe_forward.1} parent=1 // pred_fallthru
      _
    // Predicated region
    $region6: #{probe_forward.1} parent=1 // pred_check
      _
    $region7: #{probe_forward.1} parent=1 // pred_check_branch
      %11 = sbr.rel (0) target = $region9
    $region8: #{probe_forward.1} parent=1 // pred_region
      %s13 = ssub.s32 16, 16
      %14 = vsyncadd [#allocation3], %s13
      %s16 = sshll.u32 %s1, 4
      %s17 = int_to_ptr.vmem [resolvable:$true] %s16
      %19 = dma.vmem_to_smem %s17, 16, [#allocation2], [#allocation3]
    $region9: #{probe_forward.1} parent=1 // pred_fallthru
      _
    // Predicated region
    $region10: #{probe_forward.1} parent=1 // pred_check
      _
    $region11: #{probe_forward.1} parent=1 // pred_check_branch
      %21 = sbr.rel (0) target = $region13
    $region12: #{probe_forward.1} parent=1 // pred_region
      %22 = dma.done [#allocation3], 16
    $region13: #{probe_forward.1} parent=1 // pred_fallthru
      _
    %23 = sfence
    %v24 = vld [vmem:[%s0] sm:$0x1]
    %s25 = scalar_lea.vmem %s0, 1
    %v26 = vld [vmem:[%s25] sm:$0x1]
    %s27 = scalar_lea.vmem %s0, 2
    %v28 = vld [vmem:[%s27] sm:$0x1]
    %v29 = vmul.f32 %v28, 0.5235988
    %v30 = vand.u32 2147483647, %v29
    %vm31 = vcmp.le.f32.partialorder %v30, 0.7853982
    %vm32 = vcmp.lt.s32.totalorder %v29, 0
    %v33 = vand.u32 %v29, 2139095040
    %v34 = vshrl.u32 %v33, 23
    %v35 = vsub.s32 %v34, 127
    %v36 = vand.u32 2147483647, %v29
    %v37 = vand.u32 %v36, 8388607
    %v38 = vor.u32 %v37, 8388608
    %v39 = vsub.s32 0, %v38
    %v40 = vadd.s32 %v35, 1
    %vm41 = vcmp.gt.s32.totalorder %v40, 0
    %v42 = vsel %vm41, %v40, 0
    %v43 = vshrl.u32 %v42, 5
    %v44 = vand.u32 %v42, 31
    %v45 = vsub.s32 32, %v44
    %v46 = vshrl.u32 683565275, %v45
    %v47 = vshll.u32 683565275, %v44
    %v48 = vshrl.u32 2475754826, %v45
    %v49 = vor.u32 %v47, %v48
    %v50 = vshll.u32 2475754826, %v44
    %v51 = vshrl.u32 2131351028, %v45
    %v52 = vor.u32 %v50, %v51
    %v53 = vshll.u32 2131351028, %v44
    %v54 = vshrl.u32 2102212464, %v45
    %v55 = vor.u32 %v53, %v54
    %v56 = vshll.u32 2102212464, %v44
    %v57 = vshrl.u32 920167782, %v45
    %v58 = vor.u32 %v56, %v57
    %v59 = vshll.u32 920167782, %v44
    %v60 = vshrl.u32 1326507024, %v45
    %v61 = vor.u32 %v59, %v60
    %vm62 = vcmp.lt.s32.totalorder %v43, 1
    %vm63 = vcmp.lt.s32.totalorder %v43, 2
    %vm64 = vcmp.lt.s32.totalorder %v43, 3
    %vm65 = vcmp.lt.s32.totalorder %v43, 4
    %v66 = vsel %vm62, %v46, %v49
    %v67 = vsel %vm65, %v55, 2102212464
    %v68 = vsel %vm64, %v52, %v67
    %v69 = vsel %vm63, %v66, %v68
    %v70 = vsel %vm62, %v49, %v52
    %v71 = vsel %vm65, %v58, 920167782
    %v72 = vsel %vm64, %v55, %v71
    %v73 = vsel %vm63, %v70, %v72
    %v74 = vsel %vm62, %v52, %v55
    %v75 = vsel %vm65, %v61, 1326507024
    %v76 = vsel %vm64, %v58, %v75
    %v77 = vsel %vm63, %v74, %v76
    %v78 = vshll.u32 %v38, 8
    %v79 = vmul.u32.u64.compose %v78, %v77
    %v80 = vextract.low.u32 %v79
    %v81 = vextract.high.u32 %v79
    %v82 = vmul.u32.u64.compose %v78, %v73
    %v83 = vextract.low.u32 %v82
    %v84 = vextract.high.u32 %v82
    %v85 = vmul.u32 %v78, %v69
    %v86 = vadd.s32 %v81, %v83
    %vm87 = vc.u32 %v81, %v83
    %v88 = vadd.s32 %v84, 1
    %v89 = vsel %vm87, %v88, %v84
    %v90 = vadd.s32 %v85, %v89
    %v91 = vadd.s32 %v90, 536870912
    %v92 = vshrl.u32 %v91, 30
    %v93 = vshll.u32 %v92, 30
    %v94 = vsub.s32 %v90, %v93
    %vm95 = vcmp.lt.s32.totalorder %v94, 0
    %v96 = vsub.s32 0, %v94
    %v97 = vsel %vm95, %v96, %v94
    %v98 = vclz %v97
    %v99 = vsub.s32 %v98, 2
    %vm100 = vcmp.gt.s32.totalorder 0, %v99
    %v101 = vsel %vm100, 0, %v99
    %v102 = vsub.s32 32, %v101
    %v103 = vshll.u32 %v94, %v101
    %v104 = vshrl.u32 %v86, %v102
    %v105 = vor.u32 %v103, %v104
    %v106 = vsub.s32 4294967266, %v101
    %v107 = vadd.s32 %v106, 127
    %v108 = vshll.u32 %v107, 23
    %v109 = vor.u32 4788187, %v108
    %v110 = vand.u32 2147483647, %v109
    %v112 = vcvt.s32.f32 %v105
    %v113 = vmul.f32 %v112, %v110
    %v114 = vxor.u32 %v113, 2147483648
    %v115 = vsel %vm32, %v114, %v113
    %v116 = vsub.s32 4, %v92
    %v117 = vsel %vm32, %v116, %v92
    %v118 = vsel %vm31, %v29, %v115
    %v119 = vsel %vm31, 0, %v117
    %v120 = vcosq.f32.pop %v118
    %v121 = vsinq.f32.pop %v118
    %vm122 = vweird.f32 %v29
    %v123 = vadd.s32 %v119, 3
    %v124 = vand.u32 %v123, 3
    %vm125 = vcmp.lt.s32.totalorder %v124, 2
    %vm126 = vcmp.eq.s32.totalorder %v124, 0
    %v127 = vxor.u32 %v121, 2147483648
    %v128 = vsel %vm126, %v120, %v127
    %vm129 = vcmp.eq.s32.totalorder %v124, 2
    %v130 = vxor.u32 %v120, 2147483648
    %v131 = vsel %vm129, %v130, %v121
    %v132 = vsel %vm125, %v128, %v131
    %v133 = vsel %vm122, nan, %v132
    %v134 = vand.u32 2147483647, %v29
    %vm135 = vcmp.le.f32.partialorder %v134, 0.7853982
    %vm136 = vcmp.lt.s32.totalorder %v29, 0
    %v137 = vand.u32 %v29, 2139095040
    %v138 = vshrl.u32 %v137, 23
    %v139 = vsub.s32 %v138, 127
    %v140 = vand.u32 2147483647, %v29
    %v141 = vand.u32 %v140, 8388607
    %v142 = vor.u32 %v141, 8388608
    %v143 = vsub.s32 0, %v142
    %v144 = vadd.s32 %v139, 1
    %vm145 = vcmp.gt.s32.totalorder %v144, 0
    %v146 = vsel %vm145, %v144, 0
    %v147 = vshrl.u32 %v146, 5
    %v148 = vand.u32 %v146, 31
    %v149 = vsub.s32 32, %v148
    %v150 = vshrl.u32 683565275, %v149
    %v151 = vshll.u32 683565275, %v148
    %v152 = vshrl.u32 2475754826, %v149
    %v153 = vor.u32 %v151, %v152
    %v154 = vshll.u32 2475754826, %v148
    %v155 = vshrl.u32 2131351028, %v149
    %v156 = vor.u32 %v154, %v155
    %v157 = vshll.u32 2131351028, %v148
    %v158 = vshrl.u32 2102212464, %v149
    %v159 = vor.u32 %v157, %v158
    %v160 = vshll.u32 2102212464, %v148
    %v161 = vshrl.u32 920167782, %v149
    %v162 = vor.u32 %v160, %v161
    %v163 = vshll.u32 920167782, %v148
    %v164 = vshrl.u32 1326507024, %v149
    %v165 = vor.u32 %v163, %v164
    %vm166 = vcmp.lt.s32.totalorder %v147, 1
    %vm167 = vcmp.lt.s32.totalorder %v147, 2
    %vm168 = vcmp.lt.s32.totalorder %v147, 3
    %vm169 = vcmp.lt.s32.totalorder %v147, 4
    %v170 = vsel %vm166, %v150, %v153
    %v171 = vsel %vm169, %v159, 2102212464
    %v172 = vsel %vm168, %v156, %v171
    %v173 = vsel %vm167, %v170, %v172
    %v174 = vsel %vm166, %v153, %v156
    %v175 = vsel %vm169, %v162, 920167782
    %v176 = vsel %vm168, %v159, %v175
    %v177 = vsel %vm167, %v174, %v176
    %v178 = vsel %vm166, %v156, %v159
    %v179 = vsel %vm169, %v165, 1326507024
    %v180 = vsel %vm168, %v162, %v179
    %v181 = vsel %vm167, %v178, %v180
    %v182 = vshll.u32 %v142, 8
    %v183 = vmul.u32.u64.compose %v182, %v181
    %v184 = vextract.low.u32 %v183
    %v185 = vextract.high.u32 %v183
    %v186 = vmul.u32.u64.compose %v182, %v177
    %v187 = vextract.low.u32 %v186
    %v188 = vextract.high.u32 %v186
    %v189 = vmul.u32 %v182, %v173
    %v190 = vadd.s32 %v185, %v187
    %vm191 = vc.u32 %v185, %v187
    %v192 = vadd.s32 %v188, 1
    %v193 = vsel %vm191, %v192, %v188
    %v194 = vadd.s32 %v189, %v193
    %v195 = vadd.s32 %v194, 536870912
    %v196 = vshrl.u32 %v195, 30
    %v197 = vshll.u32 %v196, 30
    %v198 = vsub.s32 %v194, %v197
    %vm199 = vcmp.lt.s32.totalorder %v198, 0
    %v200 = vsub.s32 0, %v198
    %v201 = vsel %vm199, %v200, %v198
    %v202 = vclz %v201
    %v203 = vsub.s32 %v202, 2
    %vm204 = vcmp.gt.s32.totalorder 0, %v203
    %v205 = vsel %vm204, 0, %v203
    %v206 = vsub.s32 32, %v205
    %v207 = vshll.u32 %v198, %v205
    %v208 = vshrl.u32 %v190, %v206
    %v209 = vor.u32 %v207, %v208
    %v210 = vsub.s32 4294967266, %v205
    %v211 = vadd.s32 %v210, 127
    %v212 = vshll.u32 %v211, 23
    %v213 = vor.u32 4788187, %v212
    %v214 = vand.u32 2147483647, %v213
    %v216 = vcvt.s32.f32 %v209
    %v217 = vmul.f32 %v216, %v214
    %v218 = vxor.u32 %v217, 2147483648
    %v219 = vsel %vm136, %v218, %v217
    %v220 = vsub.s32 4, %v196
    %v221 = vsel %vm136, %v220, %v196
    %v222 = vsel %vm135, %v29, %v219
    %v223 = vsel %vm135, 0, %v221
    %v224 = vcosq.f32.pop %v222
    %v225 = vsinq.f32.pop %v222
    %vm226 = vweird.f32 %v29
    %v227 = vand.u32 %v223, 3
    %vm228 = vcmp.lt.s32.totalorder %v227, 2
    %vm229 = vcmp.eq.s32.totalorder %v227, 0
    %v230 = vxor.u32 %v225, 2147483648
    %v231 = vsel %vm229, %v224, %v230
    %vm232 = vcmp.eq.s32.totalorder %v227, 2
    %v233 = vxor.u32 %v224, 2147483648
    %v234 = vsel %vm232, %v233, %v225
    %v235 = vsel %vm228, %v231, %v234
    %v236 = vsel %vm226, nan, %v235
    %s237 = sld [smem:[#allocation2]]
    %v238 = vstv %s237
    %v239 = vmul.f32 %v24, %v238
    %s240 = sld [smem:[#allocation2 + $0x3]]
    %v241 = vstv %s240
    %v242 = vmul.f32 %v26, %v241
    %v243 = vadd.f32 %v239, %v242
    %s244 = sld [smem:[#allocation2 + $0x6]]
    %v245 = vstv %s244
    %v246 = vmul.f32 %v133, %v245
    %v247 = vadd.f32 %v243, %v246
    %s248 = sld [smem:[#allocation2 + $0x9]]
    %v249 = vstv %s248
    %v250 = vmul.f32 %v236, %v249
    %v251 = vadd.f32 %v247, %v250
    %s252 = sld [smem:[#allocation2 + $0xc]]
    %v253 = vstv %s252
    %v254 = vadd.f32 %v251, %v253
    %255 = vst [vmem:[%s2] sm:$0x1] %v254
    %s256 = sld [smem:[#allocation2 + $0x1]]
    %v257 = vstv %s256
    %v258 = vmul.f32 %v24, %v257
    %s259 = sld [smem:[#allocation2 + $0x4]]
    %v260 = vstv %s259
    %v261 = vmul.f32 %v26, %v260
    %v262 = vadd.f32 %v258, %v261
    %s263 = sld [smem:[#allocation2 + $0x7]]
    %v264 = vstv %s263
    %v265 = vmul.f32 %v133, %v264
    %v266 = vadd.f32 %v262, %v265
    %s267 = sld [smem:[#allocation2 + $0xa]]
    %v268 = vstv %s267
    %v269 = vmul.f32 %v236, %v268
    %v270 = vadd.f32 %v266, %v269
    %s271 = sld [smem:[#allocation2 + $0xd]]
    %v272 = vstv %s271
    %v273 = vadd.f32 %v270, %v272
    %s274 = scalar_lea.vmem %s2, 1
    %275 = vst [vmem:[%s274] sm:$0x1] %v273
    %s276 = sld [smem:[#allocation2 + $0x2]]
    %v277 = vstv %s276
    %v278 = vmul.f32 %v24, %v277
    %s279 = sld [smem:[#allocation2 + $0x5]]
    %v280 = vstv %s279
    %v281 = vmul.f32 %v26, %v280
    %v282 = vadd.f32 %v278, %v281
    %s283 = sld [smem:[#allocation2 + $0x8]]
    %v284 = vstv %s283
    %v285 = vmul.f32 %v133, %v284
    %v286 = vadd.f32 %v282, %v285
    %s287 = sld [smem:[#allocation2 + $0xb]]
    %v288 = vstv %s287
    %v289 = vmul.f32 %v236, %v288
    %v290 = vadd.f32 %v286, %v289
    %s291 = sld [smem:[#allocation2 + $0xe]]
    %v292 = vstv %s291
    %v293 = vadd.f32 %v290, %v292
    %s294 = scalar_lea.vmem %s2, 2
    %295 = vst [vmem:[%s294] sm:$0x1] %v293
    // Predicated region
    $region14: #{probe_forward.1} parent=1 // pred_check
      _
    $region15: #{probe_forward.1} parent=1 // pred_check_branch
      %297 = sbr.rel (0) target = $region17
    $region16: #{probe_forward.1} parent=1 // pred_region
      _
    $region17: #{probe_forward.1} parent=1 // pred_fallthru
      _
    // Predicated region
    $region18: #{probe_forward.1} parent=1 // pred_check
      _
    $region19: #{probe_forward.1} parent=1 // pred_check_branch
      %299 = sbr.rel (0) target = $region21
    $region20: #{probe_forward.1} parent=1 // pred_region
      _
    $region21: #{probe_forward.1} parent=1 // pred_fallthru
      _
    %300 = vsyncpa [#allocation3], 1

</llo_original>
